<compile_context>
chip_gen: v6e
topology: v6e:2x2x1
jax: 0.10.0
libtpu: 0.0.40
codegen_flags: <defaults>
</compile_context>

<pallas_src>
import math
import functools

import jax
import jax.numpy as jnp
from jax import lax
from jax.experimental import pallas as pl
from jax.experimental.pallas import tpu as pltpu


def mha_kernel(x_ref, wqkv_ref, wfc_ref, bfc_ref, o_ref, acc_ref, *,
               num_heads: int, head_size: int):
    """One batch element of multi-head self-attention + output projection.

    x_ref    : (1, T, C)     VMEM, bf16  activations
    wqkv_ref : (C, 3*H*HS)   VMEM, bf16  fused pre-transposed QKV weight (Q cols pre-scaled)
    wfc_ref  : (H*HS, C)     VMEM, bf16  pre-transposed output-projection weight
    bfc_ref  : (1, C)        VMEM, f32   output-projection bias
    o_ref    : (1, T, C)     VMEM, f32
    acc_ref  : (T, H*HS)     VMEM scratch, f32 (per-head contexts in fc-ready layout)
    """
    H, HS = num_heads, head_size
    HHS = H * HS

    x = x_ref[0]                                                    # (T, C) bf16

    # Single fused projection for Q, K and V of every head (1 MXU call instead of 3*H).
    qkv = jnp.dot(x, wqkv_ref[...],
                  preferred_element_type=jnp.float32)               # (T, 3*H*HS) f32

    for h in range(H):                                              # static unroll over heads
        q = qkv[:, h * HS:(h + 1) * HS]                             # (T, HS), already /sqrt(HS)
        k = qkv[:, HHS + h * HS:HHS + (h + 1) * HS]                 # (T, HS)
        v = qkv[:, 2 * HHS + h * HS:2 * HHS + (h + 1) * HS]         # (T, HS)

        # q @ k^T without materializing a transposed k: contract the last dims.
        att = lax.dot_general(q, k, (((1,), (1,)), ((), ())),
                              preferred_element_type=jnp.float32)   # (T, T)

        # numerically-stable softmax in f32; divide goes to the EUP via approx reciprocal
        m = jnp.max(att, axis=-1, keepdims=True)
        e = jnp.exp(att - m)
        s = jnp.sum(e, axis=-1, keepdims=True)
        p = e * pl.reciprocal(s, approx=True)                       # (T, T)

        # Write this head's context straight into its fc-input slot (no concatenate).
        acc_ref[:, h * HS:(h + 1) * HS] = jnp.dot(
            p, v, preferred_element_type=jnp.float32)               # (T, HS)

    # Single fused output projection over all heads.
    y = jnp.dot(acc_ref[...].astype(jnp.bfloat16), wfc_ref[...],
                preferred_element_type=jnp.float32) + bfc_ref[...]  # (T, C)
    o_ref[0] = y.astype(o_ref.dtype)


def multi_head_attention(x, wq, wk, wv, wfc, bfc):
    """x: (B, T, C); wq/wk/wv: (H, HS, C) (nn.Linear layout); wfc: (C, H*HS); bfc: (C,)."""
    B, T, C = x.shape
    H, HS, _ = wq.shape
    HHS = H * HS

    # One-time wrapper-side layout plumbing: fused, pre-transposed, pre-scaled weights.
    scale = 1.0 / math.sqrt(float(HS))
    wqkv_t = jnp.concatenate([wq * scale, wk, wv], axis=0)          # (3H, HS, C)
    wqkv_t = wqkv_t.reshape(3 * HHS, C).T                           # (C, 3*H*HS)
    wfc_t = wfc.T                                                   # (H*HS, C)

    # bf16 operands for the MXU; accumulation / softmax stay f32 inside the kernel.
    x_bf = x.astype(jnp.bfloat16)
    wqkv_t = wqkv_t.astype(jnp.bfloat16)
    wfc_t = wfc_t.astype(jnp.bfloat16)
    bfc2 = bfc.astype(jnp.float32).reshape(1, C)

    kernel = functools.partial(mha_kernel, num_heads=H, head_size=HS)

    return pl.pallas_call(
        kernel,
        out_shape=jax.ShapeDtypeStruct((B, T, C), x.dtype),
        grid_spec=pltpu.PrefetchScalarGridSpec(
            num_scalar_prefetch=0,
            grid=(B,),                    # parallel batch axis (>=2 keeps both v7x TCs busy)
            in_specs=[
                pl.BlockSpec((1, T, C), lambda b: (b, 0, 0)),
                pl.BlockSpec((C, 3 * HHS), lambda b: (0, 0)),       # constant block: no re-fetch
                pl.BlockSpec((HHS, C), lambda b: (0, 0)),           # constant block: no re-fetch
                pl.BlockSpec((1, C), lambda b: (0, 0)),             # constant block: no re-fetch
            ],
            out_specs=pl.BlockSpec((1, T, C), lambda b: (b, 0, 0)),
            scratch_shapes=[pltpu.VMEM((T, HHS), jnp.float32)],
        ),
        compiler_params=pltpu.CompilerParams(
            dimension_semantics=("parallel",)),
    )(x_bf, wqkv_t, wfc_t, bfc2)


def _reference(x, wq, wk, wv, wfc, bfc):
    """Pure-JAX f32 reference mirroring the PyTorch forward (eval mode, mask=None)."""
    H, HS, C = wq.shape
    outs = []
    for h in range(H):
        q = x @ wq[h].T
        k = x @ wk[h].T
        v = x @ wv[h].T
        att = jnp.einsum("btd,bsd->bts", q, k) / math.sqrt(HS)
        p = jax.nn.softmax(att, axis=-1)
        outs.append(jnp.einsum("bts,bsd->btd", p, v))
    concat = jnp.concatenate(outs, axis=-1)
    return concat @ wfc.T + bfc


if __name__ == "__main__":
    # module hyper-params (small, consistent with the forward pass)
    B, T = 2, 8                 # batch, sequence length
    dim_embed = 32              # C
    num_heads = 4               # H
    head_size = 8               # HS
    dropout = 0.1               # unused (eval mode)

    key = jax.random.PRNGKey(0)
    kx, kq, kk, kv, kf, kb = jax.random.split(key, 6)

    x = jax.random.normal(kx, (B, T, dim_embed), dtype=jnp.float32)

    # Deterministic synthetic parameters (nn.Linear weight layout: (out, in))
    lim_h = 1.0 / math.sqrt(dim_embed)
    wq = jax.random.uniform(kq, (num_heads, head_size, dim_embed),
                            minval=-lim_h, maxval=lim_h, dtype=jnp.float32)
    wk = jax.random.uniform(kk, (num_heads, head_size, dim_embed),
                            minval=-lim_h, maxval=lim_h, dtype=jnp.float32)
    wv = jax.random.uniform(kv, (num_heads, head_size, dim_embed),
                            minval=-lim_h, maxval=lim_h, dtype=jnp.float32)
    lim_f = 1.0 / math.sqrt(num_heads * head_size)
    wfc = jax.random.uniform(kf, (dim_embed, num_heads * head_size),
                             minval=-lim_f, maxval=lim_f, dtype=jnp.float32)
    bfc = jax.random.uniform(kb, (dim_embed,),
                             minval=-lim_f, maxval=lim_f, dtype=jnp.float32)

    out = multi_head_attention(x, wq, wk, wv, wfc, bfc)
    out = jax.block_until_ready(out)

    ref = _reference(x, wq, wk, wv, wfc, bfc)
    assert out.shape == (B, T, dim_embed)
    # bf16 MXU operands + approx reciprocal -> compare to the f32 reference at bf16 tolerance
    assert jnp.allclose(out, ref, atol=2e-2, rtol=2e-2), \
        f"max abs err {jnp.max(jnp.abs(out - ref))}"

    print("KERNEL_OK")
</pallas_src>

<mosaic_0001>
module attributes {stable_mosaic.version = 11 : i64} {
  func.func @mha_kernel(%arg0: i32, %arg1: memref<1x8x32xbf16, #tpu.memory_space<vmem>>, %arg2: memref<32x96xbf16, #tpu.memory_space<vmem>>, %arg3: memref<32x32xbf16, #tpu.memory_space<vmem>>, %arg4: memref<1x32xf32, #tpu.memory_space<vmem>>, %arg5: memref<1x8x32xf32, #tpu.memory_space<vmem>>, %arg6: memref<8x32xf32, #tpu.memory_space<vmem>>) attributes {dimension_semantics = [#tpu.dimension_semantics<parallel>], iteration_bounds = array<i64: 2>, scalar_prefetch = 0 : i64, scratch_operands = 1 : i64, tpu.core_type = #tpu.core_type<tc>, window_params = [{transform_indices = @transform_0, window_bounds = array<i64: 1, 8, 32>}, {pipeline_mode = #tpu.pipeline_mode<synchronous>, transform_indices = @transform_1, window_bounds = array<i64: 32, 96>}, {pipeline_mode = #tpu.pipeline_mode<synchronous>, transform_indices = @transform_2, window_bounds = array<i64: 32, 32>}, {pipeline_mode = #tpu.pipeline_mode<synchronous>, transform_indices = @transform_3, window_bounds = array<i64: 1, 32>}, {transform_indices = @transform_4, window_bounds = array<i64: 1, 8, 32>}]} {
    %c0 = arith.constant 0 : index
    %c0_0 = arith.constant 0 : index
    %c0_1 = arith.constant 0 : index
    %0 = vector.load %arg1[%c0, %c0_0, %c0_1] : memref<1x8x32xbf16, #tpu.memory_space<vmem>>, vector<1x8x32xbf16>
    %1 = vector.shape_cast %0 : vector<1x8x32xbf16> to vector<8x32xbf16>
    %c0_2 = arith.constant 0 : index
    %c0_3 = arith.constant 0 : index
    %2 = vector.load %arg2[%c0_2, %c0_3] : memref<32x96xbf16, #tpu.memory_space<vmem>>, vector<32x96xbf16>
    %cst = arith.constant dense<0.000000e+00> : vector<8x96xf32>
    %3 = tpu.matmul %1, %2, %cst {dimension_numbers = #tpu.dot_dimension_numbers<[1], [0], [0], [1], [0, 0, 1, 1], [], []>} : vector<8x32xbf16>, vector<32x96xbf16>, vector<8x96xf32> -> vector<8x96xf32>
    %4 = vector.extract_strided_slice %3 {offsets = [0, 0], sizes = [8, 8], strides = [1, 1]} : vector<8x96xf32> to vector<8x8xf32>
    %5 = vector.extract_strided_slice %3 {offsets = [0, 32], sizes = [8, 8], strides = [1, 1]} : vector<8x96xf32> to vector<8x8xf32>
    %6 = vector.extract_strided_slice %3 {offsets = [0, 64], sizes = [8, 8], strides = [1, 1]} : vector<8x96xf32> to vector<8x8xf32>
    %cst_4 = arith.constant dense<0.000000e+00> : vector<8x8xf32>
    %7 = tpu.matmul %4, %5, %cst_4 {dimension_numbers = #tpu.dot_dimension_numbers<[1], [1], [0], [0], [0, 0, 1, 0], [], []>} : vector<8x8xf32>, vector<8x8xf32>, vector<8x8xf32> -> vector<8x8xf32>
    %cst_5 = arith.constant dense<0xFF800000> : vector<8xf32>
    %8 = vector.multi_reduction <maximumf>, %7, %cst_5 [1] : vector<8x8xf32> to vector<8xf32>
    %9 = vector.shape_cast %8 : vector<8xf32> to vector<8x1xf32>
    %10 = vector.broadcast %9 : vector<8x1xf32> to vector<8x8xf32>
    %11 = arith.subf %7, %10 : vector<8x8xf32>
    %12 = math.exp %11 : vector<8x8xf32>
    %cst_6 = arith.constant dense<0.000000e+00> : vector<8xf32>
    %13 = vector.multi_reduction <add>, %12, %cst_6 [1] : vector<8x8xf32> to vector<8xf32>
    %14 = vector.shape_cast %13 : vector<8xf32> to vector<8x1xf32>
    %15 = tpu.reciprocal %14 {approx = true} : vector<8x1xf32> -> vector<8x1xf32>
    %16 = vector.broadcast %15 : vector<8x1xf32> to vector<8x8xf32>
    %17 = arith.mulf %12, %16 : vector<8x8xf32>
    %cst_7 = arith.constant dense<0.000000e+00> : vector<8x8xf32>
    %18 = tpu.matmul %17, %6, %cst_7 {dimension_numbers = #tpu.dot_dimension_numbers<[1], [0], [0], [1], [0, 0, 1, 1], [], []>} : vector<8x8xf32>, vector<8x8xf32>, vector<8x8xf32> -> vector<8x8xf32>
    %c0_8 = arith.constant 0 : index
    %c0_9 = arith.constant 0 : index
    %19 = vector.load %arg6[%c0_8, %c0_9] : memref<8x32xf32, #tpu.memory_space<vmem>>, vector<8x8xf32>
    tpu.vector_store %arg6[%c0_8, %c0_9], %18 {strides = array<i32>} : memref<8x32xf32, #tpu.memory_space<vmem>>, vector<8x8xf32>,
    %20 = vector.extract_strided_slice %3 {offsets = [0, 8], sizes = [8, 8], strides = [1, 1]} : vector<8x96xf32> to vector<8x8xf32>
    %21 = vector.extract_strided_slice %3 {offsets = [0, 40], sizes = [8, 8], strides = [1, 1]} : vector<8x96xf32> to vector<8x8xf32>
    %22 = vector.extract_strided_slice %3 {offsets = [0, 72], sizes = [8, 8], strides = [1, 1]} : vector<8x96xf32> to vector<8x8xf32>
    %cst_10 = arith.constant dense<0.000000e+00> : vector<8x8xf32>
    %23 = tpu.matmul %20, %21, %cst_10 {dimension_numbers = #tpu.dot_dimension_numbers<[1], [1], [0], [0], [0, 0, 1, 0], [], []>} : vector<8x8xf32>, vector<8x8xf32>, vector<8x8xf32> -> vector<8x8xf32>
    %cst_11 = arith.constant dense<0xFF800000> : vector<8xf32>
    %24 = vector.multi_reduction <maximumf>, %23, %cst_11 [1] : vector<8x8xf32> to vector<8xf32>
    %25 = vector.shape_cast %24 : vector<8xf32> to vector<8x1xf32>
    %26 = vector.broadcast %25 : vector<8x1xf32> to vector<8x8xf32>
    %27 = arith.subf %23, %26 : vector<8x8xf32>
    %28 = math.exp %27 : vector<8x8xf32>
    %cst_12 = arith.constant dense<0.000000e+00> : vector<8xf32>
    %29 = vector.multi_reduction <add>, %28, %cst_12 [1] : vector<8x8xf32> to vector<8xf32>
    %30 = vector.shape_cast %29 : vector<8xf32> to vector<8x1xf32>
    %31 = tpu.reciprocal %30 {approx = true} : vector<8x1xf32> -> vector<8x1xf32>
    %32 = vector.broadcast %31 : vector<8x1xf32> to vector<8x8xf32>
    %33 = arith.mulf %28, %32 : vector<8x8xf32>
    %cst_13 = arith.constant dense<0.000000e+00> : vector<8x8xf32>
    %34 = tpu.matmul %33, %22, %cst_13 {dimension_numbers = #tpu.dot_dimension_numbers<[1], [0], [0], [1], [0, 0, 1, 1], [], []>} : vector<8x8xf32>, vector<8x8xf32>, vector<8x8xf32> -> vector<8x8xf32>
    %c0_14 = arith.constant 0 : index
    %c8 = arith.constant 8 : index
    %35 = vector.load %arg6[%c0_14, %c8] : memref<8x32xf32, #tpu.memory_space<vmem>>, vector<8x8xf32>
    tpu.vector_store %arg6[%c0_14, %c8], %34 {strides = array<i32>} : memref<8x32xf32, #tpu.memory_space<vmem>>, vector<8x8xf32>,
    %36 = vector.extract_strided_slice %3 {offsets = [0, 16], sizes = [8, 8], strides = [1, 1]} : vector<8x96xf32> to vector<8x8xf32>
    %37 = vector.extract_strided_slice %3 {offsets = [0, 48], sizes = [8, 8], strides = [1, 1]} : vector<8x96xf32> to vector<8x8xf32>
    %38 = vector.extract_strided_slice %3 {offsets = [0, 80], sizes = [8, 8], strides = [1, 1]} : vector<8x96xf32> to vector<8x8xf32>
    %cst_15 = arith.constant dense<0.000000e+00> : vector<8x8xf32>
    %39 = tpu.matmul %36, %37, %cst_15 {dimension_numbers = #tpu.dot_dimension_numbers<[1], [1], [0], [0], [0, 0, 1, 0], [], []>} : vector<8x8xf32>, vector<8x8xf32>, vector<8x8xf32> -> vector<8x8xf32>
    %cst_16 = arith.constant dense<0xFF800000> : vector<8xf32>
    %40 = vector.multi_reduction <maximumf>, %39, %cst_16 [1] : vector<8x8xf32> to vector<8xf32>
    %41 = vector.shape_cast %40 : vector<8xf32> to vector<8x1xf32>
    %42 = vector.broadcast %41 : vector<8x1xf32> to vector<8x8xf32>
    %43 = arith.subf %39, %42 : vector<8x8xf32>
    %44 = math.exp %43 : vector<8x8xf32>
    %cst_17 = arith.constant dense<0.000000e+00> : vector<8xf32>
    %45 = vector.multi_reduction <add>, %44, %cst_17 [1] : vector<8x8xf32> to vector<8xf32>
    %46 = vector.shape_cast %45 : vector<8xf32> to vector<8x1xf32>
    %47 = tpu.reciprocal %46 {approx = true} : vector<8x1xf32> -> vector<8x1xf32>
    %48 = vector.broadcast %47 : vector<8x1xf32> to vector<8x8xf32>
    %49 = arith.mulf %44, %48 : vector<8x8xf32>
    %cst_18 = arith.constant dense<0.000000e+00> : vector<8x8xf32>
    %50 = tpu.matmul %49, %38, %cst_18 {dimension_numbers = #tpu.dot_dimension_numbers<[1], [0], [0], [1], [0, 0, 1, 1], [], []>} : vector<8x8xf32>, vector<8x8xf32>, vector<8x8xf32> -> vector<8x8xf32>
    %c0_19 = arith.constant 0 : index
    %c16 = arith.constant 16 : index
    %51 = vector.load %arg6[%c0_19, %c16] : memref<8x32xf32, #tpu.memory_space<vmem>>, vector<8x8xf32>
    tpu.vector_store %arg6[%c0_19, %c16], %50 {strides = array<i32>} : memref<8x32xf32, #tpu.memory_space<vmem>>, vector<8x8xf32>,
    %52 = vector.extract_strided_slice %3 {offsets = [0, 24], sizes = [8, 8], strides = [1, 1]} : vector<8x96xf32> to vector<8x8xf32>
    %53 = vector.extract_strided_slice %3 {offsets = [0, 56], sizes = [8, 8], strides = [1, 1]} : vector<8x96xf32> to vector<8x8xf32>
    %54 = vector.extract_strided_slice %3 {offsets = [0, 88], sizes = [8, 8], strides = [1, 1]} : vector<8x96xf32> to vector<8x8xf32>
    %cst_20 = arith.constant dense<0.000000e+00> : vector<8x8xf32>
    %55 = tpu.matmul %52, %53, %cst_20 {dimension_numbers = #tpu.dot_dimension_numbers<[1], [1], [0], [0], [0, 0, 1, 0], [], []>} : vector<8x8xf32>, vector<8x8xf32>, vector<8x8xf32> -> vector<8x8xf32>
    %cst_21 = arith.constant dense<0xFF800000> : vector<8xf32>
    %56 = vector.multi_reduction <maximumf>, %55, %cst_21 [1] : vector<8x8xf32> to vector<8xf32>
    %57 = vector.shape_cast %56 : vector<8xf32> to vector<8x1xf32>
    %58 = vector.broadcast %57 : vector<8x1xf32> to vector<8x8xf32>
    %59 = arith.subf %55, %58 : vector<8x8xf32>
    %60 = math.exp %59 : vector<8x8xf32>
    %cst_22 = arith.constant dense<0.000000e+00> : vector<8xf32>
    %61 = vector.multi_reduction <add>, %60, %cst_22 [1] : vector<8x8xf32> to vector<8xf32>
    %62 = vector.shape_cast %61 : vector<8xf32> to vector<8x1xf32>
    %63 = tpu.reciprocal %62 {approx = true} : vector<8x1xf32> -> vector<8x1xf32>
    %64 = vector.broadcast %63 : vector<8x1xf32> to vector<8x8xf32>
    %65 = arith.mulf %60, %64 : vector<8x8xf32>
    %cst_23 = arith.constant dense<0.000000e+00> : vector<8x8xf32>
    %66 = tpu.matmul %65, %54, %cst_23 {dimension_numbers = #tpu.dot_dimension_numbers<[1], [0], [0], [1], [0, 0, 1, 1], [], []>} : vector<8x8xf32>, vector<8x8xf32>, vector<8x8xf32> -> vector<8x8xf32>
    %c0_24 = arith.constant 0 : index
    %c24 = arith.constant 24 : index
    %67 = vector.load %arg6[%c0_24, %c24] : memref<8x32xf32, #tpu.memory_space<vmem>>, vector<8x8xf32>
    tpu.vector_store %arg6[%c0_24, %c24], %66 {strides = array<i32>} : memref<8x32xf32, #tpu.memory_space<vmem>>, vector<8x8xf32>,
    %c0_25 = arith.constant 0 : index
    %c0_26 = arith.constant 0 : index
    %68 = vector.load %arg6[%c0_25, %c0_26] : memref<8x32xf32, #tpu.memory_space<vmem>>, vector<8x32xf32>
    %69 = arith.truncf %68 : vector<8x32xf32> to vector<8x32xbf16>
    %c0_27 = arith.constant 0 : index
    %c0_28 = arith.constant 0 : index
    %70 = vector.load %arg3[%c0_27, %c0_28] : memref<32x32xbf16, #tpu.memory_space<vmem>>, vector<32x32xbf16>
    %cst_29 = arith.constant dense<0.000000e+00> : vector<8x32xf32>
    %71 = tpu.matmul %69, %70, %cst_29 {dimension_numbers = #tpu.dot_dimension_numbers<[1], [0], [0], [1], [0, 0, 1, 1], [], []>} : vector<8x32xbf16>, vector<32x32xbf16>, vector<8x32xf32> -> vector<8x32xf32>
    %c0_30 = arith.constant 0 : index
    %c0_31 = arith.constant 0 : index
    %72 = vector.load %arg4[%c0_30, %c0_31] : memref<1x32xf32, #tpu.memory_space<vmem>>, vector<1x32xf32>
    %73 = vector.broadcast %72 : vector<1x32xf32> to vector<8x32xf32>
    %74 = arith.addf %71, %73 : vector<8x32xf32>
    %c0_32 = arith.constant 0 : index
    %c0_33 = arith.constant 0 : index
    %c0_34 = arith.constant 0 : index
    %75 = vector.load %arg5[%c0_32, %c0_33, %c0_34] : memref<1x8x32xf32, #tpu.memory_space<vmem>>, vector<1x8x32xf32>
    %76 = vector.shape_cast %75 : vector<1x8x32xf32> to vector<8x32xf32>
    %77 = vector.shape_cast %74 : vector<8x32xf32> to vector<1x8x32xf32>
    tpu.vector_store %arg5[%c0_32, %c0_33, %c0_34], %77 {strides = array<i32>} : memref<1x8x32xf32, #tpu.memory_space<vmem>>, vector<1x8x32xf32>,
    return
  }
  func.func @transform_0(%arg0: i32) -> (i32, i32, i32) {
    %c0_i32 = arith.constant 0 : i32
    %c0_i32_0 = arith.constant 0 : i32
    %c0_i32_1 = arith.constant 0 : i32
    return %arg0, %c0_i32, %c0_i32_0 : i32, i32, i32
  }
  func.func @transform_1(%arg0: i32) -> (i32, i32) {
    %c0_i32 = arith.constant 0 : i32
    %c0_i32_0 = arith.constant 0 : i32
    %c0_i32_1 = arith.constant 0 : i32
    return %c0_i32, %c0_i32_0 : i32, i32
  }
  func.func @transform_2(%arg0: i32) -> (i32, i32) {
    %c0_i32 = arith.constant 0 : i32
    %c0_i32_0 = arith.constant 0 : i32
    %c0_i32_1 = arith.constant 0 : i32
    return %c0_i32, %c0_i32_0 : i32, i32
  }
  func.func @transform_3(%arg0: i32) -> (i32, i32) {
    %c0_i32 = arith.constant 0 : i32
    %c0_i32_0 = arith.constant 0 : i32
    %c0_i32_1 = arith.constant 0 : i32
    return %c0_i32, %c0_i32_0 : i32, i32
  }
  func.func @transform_4(%arg0: i32) -> (i32, i32, i32) {
    %c0_i32 = arith.constant 0 : i32
    %c0_i32_0 = arith.constant 0 : i32
    %c0_i32_1 = arith.constant 0 : i32
    return %arg0, %c0_i32, %c0_i32_0 : i32, i32, i32
  }
}

</mosaic_0001>

<llo_original>
// kernel: tpu_custom_call.1
$region0: #{tpu_custom_call.1}
  #allocation0 [shape = 'u32[]', space=smem, size = 0x4, offset = 0x4, fixed_abs, tag = 'smem constant byte address 0x4 - core index']
  #allocation1 [shape = 'u32[144,128]{1,0:T(1,128)}', space=vmem, size = 0x12000, scoped, tag = 'internal scratch']
  #allocation2 [shape = 'f32[8,32]{1,0:T(8,128)}', space=vmem, size = 0x1000, scoped, tag = 'scratch operand']
  %s0 = inlined_call_operand.hbm [shape: bf16[2,8,32], index: 0, kind: input, shape index: {}]
  %s1 = inlined_call_operand.hbm [shape: bf16[32,96], index: 1, kind: input, shape index: {}]
  %s2 = inlined_call_operand.hbm [shape: bf16[32,32], index: 2, kind: input, shape index: {}]
  %s3 = inlined_call_operand.vmem [shape: f32[1,32], index: 3, kind: input, shape index: {}]
  %s4 = inlined_call_operand.hbm [shape: f32[2,8,32], index: 4, kind: output, shape index: {}]
  %s5 = sld [smem:[#allocation0]]
  $region61: #{tpu_custom_call.1} parent=0
    _
  %s7 = ssub.s32 1, %s5
  %s8 = scalar_select 0, %s7, %s5
  $region1: #{tpu_custom_call.1} parent=0
    #allocation3 [shape = 'u8[4096]{0}', space=vmem, size = 0x1000, scoped, tag = 'input window, operand 0']
    #allocation4 [shape = 's32[2]{0}', space=sflag, size = 0x8, scoped, tag = 'scoped memory for tpu_custom_call.1']
    #allocation5 [shape = 's32[2]{0}', space=sflag, size = 0x8, scoped, tag = 'scoped memory for tpu_custom_call.1']
    #allocation6 [shape = 'u8[8192]{0}', space=vmem, size = 0x2000, scoped, tag = 'input window, operand 1, single buffered']
    #allocation7 [shape = 's32[1]{0}', space=sflag, size = 0x4, scoped, tag = 'scoped memory for tpu_custom_call.1']
    #allocation8 [shape = 'u8[8192]{0}', space=vmem, size = 0x2000, scoped, tag = 'input window, operand 2, single buffered']
    #allocation9 [shape = 'u8[8192]{0}', space=vmem, size = 0x2000, scoped, tag = 'output window, operand 0']
    %9 = vsyncpa [#allocation4], 0
    %s10 = scalar_lea.sflag [#allocation4], 1
    %11 = vsyncpa %s10, 0
    %12 = vsyncpa [#allocation7], 0
    %13 = vsyncpa [#allocation5], 0
    %s14 = scalar_lea.sflag [#allocation5], 1
    %15 = vsyncpa %s14, 0
    loop: start=0, step=1, limit=4
    $region2: #{tpu_custom_call.1} parent=1 // loop_pre_header
      _
    $region3: #{tpu_custom_call.1} parent=1 // loop_header
      %s17 = sphi 0, %s21
      %p18 = scmp.ge.s32.totalorder %s17, 4
      %s27 = sphi 0, %s29
      %s30 = sphi 0, %s27
      %s31 = sphi 0, %s30
      %s47 = sphi 0, %s31
      %s51 = sphi 0, %s51
      %s53 = sphi 0, %s51
      %s54 = sphi 0, %s53
      %s68 = sphi 0, %s54
      %s72 = sphi 0, %s72
      %s74 = sphi 0, %s72
      %s75 = sphi 0, %s74
      %s89 = sphi 0, %s75
      %s93 = sphi 0, %s93
      %s95 = sphi 0, %s93
      %s96 = sphi 0, %s95
      %s110 = sphi 0, %s96
      %s116 = sphi 0, %s118
      %s119 = sphi 0, %s116
      %s120 = sphi 0, %s119
      %s136 = sphi 0, %s120
    $region4: #{tpu_custom_call.1} parent=1 // loop_header_branch
      %20 = sbr.rel (%p18) target = $region8
    $region5: #{tpu_custom_call.1} parent=1 // loop_body
      %s22 = ssub.s32 %s17, 1
      %s23 = ssub.s32 %s17, 2
      %s24 = sadd.s32 %s17, 1
      %s25 = ssub.s32 %s17, %s24
      %p26 = scmp.eq.s32.totalorder %s25, 0
      %s28 = sadd.s32 %s27, 1
      %s29 = scalar_select %p26, %s27, %s28
      %p32 = pneg %p26
      %p33 = scmp.eq.s32.totalorder %s17, 1
      %p34 = por %p32, %p33
      %p35 = scmp.ne.s32.totalorder %s27, %s30
      %p36 = scmp.eq.s32.totalorder %s17, 0
      %p37 = por %p35, %p36
      %p38 = scmp.ne.s32.totalorder %s27, %s30
      %p39 = scmp.eq.s32.totalorder %s22, 1
      %p40 = por %p38, %p39
      %p41 = scmp.ne.s32.totalorder %s30, %s31
      %p42 = scmp.eq.s32.totalorder %s22, 0
      %p43 = por %p41, %p42
      %p44 = scmp.ne.s32.totalorder %s30, %s31
      %p45 = scmp.eq.s32.totalorder %s23, 1
      %p46 = por %p44, %p45
      %p48 = scmp.ne.s32.totalorder %s31, %s47
      %p49 = scmp.eq.s32.totalorder %s23, 0
      %p50 = por %p48, %p49
      %s52 = sadd.s32 %s51, 1
      %p55 = scmp.eq.s32.totalorder %s17, 1
      %p56 = scmp.ne.s32.totalorder %s51, %s53
      %p57 = scmp.eq.s32.totalorder %s17, 0
      %p58 = por %p56, %p57
      %p59 = scmp.ne.s32.totalorder %s51, %s53
      %p60 = scmp.eq.s32.totalorder %s22, 1
      %p61 = por %p59, %p60
      %p62 = scmp.ne.s32.totalorder %s53, %s54
      %p63 = scmp.eq.s32.totalorder %s22, 0
      %p64 = por %p62, %p63
      %p65 = scmp.ne.s32.totalorder %s53, %s54
      %p66 = scmp.eq.s32.totalorder %s23, 1
      %p67 = por %p65, %p66
      %p69 = scmp.ne.s32.totalorder %s54, %s68
      %p70 = scmp.eq.s32.totalorder %s23, 0
      %p71 = por %p69, %p70
      %s73 = sadd.s32 %s72, 1
      %p76 = scmp.eq.s32.totalorder %s17, 1
      %p77 = scmp.ne.s32.totalorder %s72, %s74
      %p78 = scmp.eq.s32.totalorder %s17, 0
      %p79 = por %p77, %p78
      %p80 = scmp.ne.s32.totalorder %s72, %s74
      %p81 = scmp.eq.s32.totalorder %s22, 1
      %p82 = por %p80, %p81
      %p83 = scmp.ne.s32.totalorder %s74, %s75
      %p84 = scmp.eq.s32.totalorder %s22, 0
      %p85 = por %p83, %p84
      %p86 = scmp.ne.s32.totalorder %s74, %s75
      %p87 = scmp.eq.s32.totalorder %s23, 1
      %p88 = por %p86, %p87
      %p90 = scmp.ne.s32.totalorder %s75, %s89
      %p91 = scmp.eq.s32.totalorder %s23, 0
      %p92 = por %p90, %p91
      %s94 = sadd.s32 %s93, 1
      %p97 = scmp.eq.s32.totalorder %s17, 1
      %p98 = scmp.ne.s32.totalorder %s93, %s95
      %p99 = scmp.eq.s32.totalorder %s17, 0
      %p100 = por %p98, %p99
      %p101 = scmp.ne.s32.totalorder %s93, %s95
      %p102 = scmp.eq.s32.totalorder %s22, 1
      %p103 = por %p101, %p102
      %p104 = scmp.ne.s32.totalorder %s95, %s96
      %p105 = scmp.eq.s32.totalorder %s22, 0
      %p106 = por %p104, %p105
      %p107 = scmp.ne.s32.totalorder %s95, %s96
      %p108 = scmp.eq.s32.totalorder %s23, 1
      %p109 = por %p107, %p108
      %p111 = scmp.ne.s32.totalorder %s96, %s110
      %p112 = scmp.eq.s32.totalorder %s23, 0
      %p113 = por %p111, %p112
      %s114 = ssub.s32 %s17, %s24
      %p115 = scmp.eq.s32.totalorder %s114, 0
      %s117 = sadd.s32 %s116, 1
      %s118 = scalar_select %p115, %s116, %s117
      %p121 = pneg %p115
      %p122 = scmp.eq.s32.totalorder %s17, 1
      %p123 = por %p121, %p122
      %p124 = scmp.ne.s32.totalorder %s116, %s119
      %p125 = scmp.eq.s32.totalorder %s17, 0
      %p126 = por %p124, %p125
      %p127 = scmp.ne.s32.totalorder %s116, %s119
      %p128 = scmp.eq.s32.totalorder %s22, 1
      %p129 = por %p127, %p128
      %p130 = scmp.ne.s32.totalorder %s119, %s120
      %p131 = scmp.eq.s32.totalorder %s22, 0
      %p132 = por %p130, %p131
      %p133 = scmp.ne.s32.totalorder %s119, %s120
      %p134 = scmp.eq.s32.totalorder %s23, 1
      %p135 = por %p133, %p134
      %p137 = scmp.ne.s32.totalorder %s120, %s136
      %p138 = scmp.eq.s32.totalorder %s23, 0
      %p139 = por %p137, %p138
      %p140 = scmp.le.s32.totalorder 1, %s17
      %p141 = scmp.lt.s32.totalorder %s17, 3
      %p142 = pnand %p140, %p141
      %p143 = pneg %p142
      // Predicated region
      $region9: #{tpu_custom_call.1} parent=5 // pred_check
        _
      $region10: #{tpu_custom_call.1} parent=5 // pred_check_branch
        %145 = sbr.rel (%p142) target = $region12
      $region11: #{tpu_custom_call.1} parent=5 // pred_region
        %s146 = ssub.s32 %s17, 1
        // Predicated region
        $region13: #{tpu_custom_call.1} parent=11 // pred_check
          %p147 = pneg %p64
        $region14: #{tpu_custom_call.1} parent=11 // pred_check_branch
          %149 = sbr.rel (%p147) target = $region16
        $region15: #{tpu_custom_call.1} parent=11 // pred_region
          %s151 = ssub.s32 256, 256
          %152 = vsyncadd [#allocation7], %s151
          %s153 = sshll.u32 [#allocation6], 4
          %s154 = int_to_ptr.vmem [resolvable:$true] %s153
          %159 = dma.hbm_to_vmem [thread:$0]  %s1, 256, %s154, [#allocation7], 64, 64, 4
        $region16: #{tpu_custom_call.1} parent=11 // pred_fallthru
          _
        // Predicated region
        $region17: #{tpu_custom_call.1} parent=11 // pred_check
          %p160 = pneg %p85
        $region18: #{tpu_custom_call.1} parent=11 // pred_check_branch
          %162 = sbr.rel (%p160) target = $region20
        $region19: #{tpu_custom_call.1} parent=11 // pred_region
          %s164 = ssub.s32 256, 256
          %165 = vsyncadd [#allocation7], %s164
          %s166 = sshll.u32 [#allocation8], 4
          %s167 = int_to_ptr.vmem [resolvable:$true] %s166
          %172 = dma.hbm_to_vmem [thread:$0]  %s2, 256, %s167, [#allocation7], 64, 64, 4
        $region20: #{tpu_custom_call.1} parent=11 // pred_fallthru
          _
        // Predicated region
        $region21: #{tpu_custom_call.1} parent=11 // pred_check
          %p173 = pneg %p106
        $region22: #{tpu_custom_call.1} parent=11 // pred_check_branch
          %175 = sbr.rel (%p173) target = $region24
        $region23: #{tpu_custom_call.1} parent=11 // pred_region
          _
        $region24: #{tpu_custom_call.1} parent=11 // pred_fallthru
          _
      $region12: #{tpu_custom_call.1} parent=5 // pred_fallthru
        _
      %p176 = scmp.lt.s32.totalorder %s17, 2
      // Predicated region
      $region25: #{tpu_custom_call.1} parent=5 // pred_check
        %p177 = pneg %p176
      $region26: #{tpu_custom_call.1} parent=5 // pred_check_branch
        %179 = sbr.rel (%p177) target = $region28
      $region27: #{tpu_custom_call.1} parent=5 // pred_region
        // Predicated region
        $region29: #{tpu_custom_call.1} parent=27 // pred_check
          %p180 = pneg %p37
        $region30: #{tpu_custom_call.1} parent=27 // pred_check_branch
          %182 = sbr.rel (%p180) target = $region32
        $region31: #{tpu_custom_call.1} parent=27 // pred_region
          %s183 = sand.u32 %s27, 1
          %s184 = scalar_lea.sflag [#allocation4], %s183
          %s185 = sand.u32 %s27, 1
          %s186 = smul.addr %s185, 4
          %s187 = scalar_lea.vmem [#allocation3], %s186
          %s189 = ssub.s32 64, 64
          %190 = vsyncadd %s184, %s189
          %s191 = smul.addr %s17, 64
          %s192 = scalar_lea.hbm %s0, %s191
          %s194 = sshll.u32 %s187, 4
          %s195 = int_to_ptr.vmem [resolvable:$true] %s194
          %197 = dma.hbm_to_vmem [thread:$0]  %s192, 64, %s195, %s184
        $region32: #{tpu_custom_call.1} parent=27 // pred_fallthru
          _
      $region28: #{tpu_custom_call.1} parent=5 // pred_fallthru
        _
      %p198 = scmp.le.s32.totalorder 1, %s17
      %p199 = scmp.lt.s32.totalorder %s17, 3
      %p200 = pnand %p198, %p199
      %p201 = pneg %p200
      // Predicated region
      $region33: #{tpu_custom_call.1} parent=5 // pred_check
        _
      $region34: #{tpu_custom_call.1} parent=5 // pred_check_branch
        %203 = sbr.rel (%p200) target = $region36
      $region35: #{tpu_custom_call.1} parent=5 // pred_region
        %s204 = ssub.s32 %s17, 1
        %s205 = sand.u32 %s30, 1
        %s206 = scalar_lea.sflag [#allocation4], %s205
        %s207 = sand.u32 %s30, 1
        %s208 = smul.addr %s207, 4
        %s209 = scalar_lea.vmem [#allocation3], %s208
        // Predicated region
        $region37: #{tpu_custom_call.1} parent=35 // pred_check
          %p210 = pneg %p43
        $region38: #{tpu_custom_call.1} parent=35 // pred_check_branch
          %212 = sbr.rel (%p210) target = $region40
        $region39: #{tpu_custom_call.1} parent=35 // pred_region
          %213 = dma.done %s206, 64
        $region40: #{tpu_custom_call.1} parent=35 // pred_fallthru
          _
        // Predicated region
        $region41: #{tpu_custom_call.1} parent=35 // pred_check
          %p214 = pneg %p64
        $region42: #{tpu_custom_call.1} parent=35 // pred_check_branch
          %216 = sbr.rel (%p214) target = $region44
        $region43: #{tpu_custom_call.1} parent=35 // pred_region
          %217 = dma.done [#allocation7], 256
        $region44: #{tpu_custom_call.1} parent=35 // pred_fallthru
          _
        // Predicated region
        $region45: #{tpu_custom_call.1} parent=35 // pred_check
          %p218 = pneg %p85
        $region46: #{tpu_custom_call.1} parent=35 // pred_check_branch
          %220 = sbr.rel (%p218) target = $region48
        $region47: #{tpu_custom_call.1} parent=35 // pred_region
          %221 = dma.done [#allocation7], 256
        $region48: #{tpu_custom_call.1} parent=35 // pred_fallthru
          _
        %s222 = sand.u32 %s30, 1
        %s223 = scalar_lea.sflag [#allocation4], %s222
        %s224 = sand.u32 %s30, 1
        %s225 = smul.addr %s224, 4
        %s226 = scalar_lea.vmem [#allocation3], %s225
        %p227 = pneg %p43
        %p228 = pneg %p40
        %p229 = pneg %p64
        %p230 = pneg %p61
        %p231 = pneg %p85
        %p232 = pneg %p82
        %p233 = pneg %p106
        %p234 = pneg %p103
        %p235 = pneg %p132
        %p236 = pneg %p129
        %s237 = sand.u32 %s119, 1
        %s238 = scalar_lea.sflag [#allocation5], %s237
        %s239 = sand.u32 %s119, 1
        %s240 = smul.addr %s239, 8
        %s241 = scalar_lea.vmem [#allocation9], %s240
        %v243 = vld [vmem:[%s209] sm:$0xf]
        %v244 = vld [vmem:[#allocation6] sm:$0xf]
        %v245 = vld [vmem:[#allocation6 + $0x4] sm:$0xf]
        %v246 = vld [vmem:[#allocation6 + $0x8] sm:$0xf]
        %v247 = vld [vmem:[#allocation6 + $0xc] sm:$0xf]
        %v252 = vunpack.c.l.b16 %v244
        %v253 = vunpack.c.l.b16 %v245
        %v254 = vunpack.c.l.b16 %v246
        %v255 = vunpack.c.l.b16 %v247
        %v256 = vpack.c.b16 %v253, %v252
        %v257 = vpack.c.b16 %v255, %v254
        %vm260 = vcmask 261120
        %v262 = vsel %vm260, %v243, 0
        %264 = vmatprep.subr.bf16.mxu0 0
        %265 = vmatpush1.bf16.msra.mxu0 0
        %266 = vmatprep.subr.bf16.mxu0 0
        %267 = vmatpush1.bf16.msra.mxu0 0
        %268 = vmatprep.subr.bf16.mxu0 0
        %269 = vmatpush1.bf16.msra.mxu0 0
        %270 = vmatprep.subr.bf16.mxu0 0
        %271 = vmatpush1.bf16.msra.mxu0 0
        %272 = vmatprep.subr.bf16.mxu0 0
        %273 = vmatpush1.bf16.msra.mxu0 0
        %274 = vmatprep.subr.bf16.mxu0 0
        %275 = vmatpush1.bf16.msra.mxu0 0
        %276 = vmatprep.subr.bf16.mxu0 0
        %277 = vmatpush1.bf16.msra.mxu0 %v257
        %278 = vmatprep.subr.bf16.mxu0 0
        %279 = vmatpush1.bf16.msra.mxu0 %v256
        %280 = vmatprep.subr.bf16.mxu0 0
        %281 = vmatpush2.bf16.msra.mxu0 0
        %282 = vmatprep.subr.bf16.mxu0 0
        %283 = vmatpush2.bf16.msra.mxu0 0
        %284 = vmatprep.subr.bf16.mxu0 0
        %285 = vmatpush2.bf16.msra.mxu0 0
        %286 = vmatprep.subr.bf16.mxu0 0
        %287 = vmatpush2.bf16.msra.mxu0 0
        %288 = vmatprep.subr.bf16.mxu0 0
        %289 = vmatpush2.bf16.msra.mxu0 0
        %290 = vmatprep.subr.bf16.mxu0 0
        %291 = vmatpush2.bf16.msra.mxu0 0
        %292 = vmatprep.subr.bf16.mxu0 0
        %293 = vmatpush2.bf16.msra.mxu0 0
        %294 = vmatprep.subr.bf16.mxu0 0
        %295 = vmatpush2.bf16.msra.mxu0 0
        %296 = vmatprep.mubr.bf16.mxu0 0
        %297 = vmatmul.mubr.bf16.gmra.mxu0 %v262
        %v298 = vpop.f32.mrf.mxu0
        %v299 = vadd.f32 0.0, %v298
        %v300 = vpop.f32.mrf.mxu0
        %v301 = vpop.f32.mrf.mxu0
        %v302 = vpop.f32.mrf.mxu0
        %303 = vdwg.mxu0
        %305 = vrot.lane.b32.xlu0 %v299, 96
        %v306 = vpop.permute.xlu0 %305
        %vm307 = vcmask 64512
        %v308 = vsel %vm307, %v299, 0
        %v310 = vsel %vm307, %v306, 0
        %312 = vmatprep.subr.mxu0 0.0
        %313 = vmatpush1.xpose.msra.mxu0 0.0
        %314 = vmatprep.subr.mxu0 0.0
        %315 = vmatpush1.xpose.msra.mxu0 0.0
        %316 = vmatprep.subr.mxu0 0.0
        %317 = vmatpush1.xpose.msra.mxu0 0.0
        %318 = vmatprep.subr.mxu0 0.0
        %319 = vmatpush1.xpose.msra.mxu0 0.0
        %320 = vmatprep.subr.mxu0 0.0
        %321 = vmatpush1.xpose.msra.mxu0 0.0
        %322 = vmatprep.subr.mxu0 0.0
        %323 = vmatpush1.xpose.msra.mxu0 0.0
        %324 = vmatprep.subr.mxu0 0.0
        %325 = vmatpush1.xpose.msra.mxu0 0.0
        %326 = vmatprep.subr.mxu0 0.0
        %327 = vmatpush1.xpose.msra.mxu0 0.0
        %328 = vmatprep.subr.mxu0 0.0
        %329 = vmatpush1.xpose.msra.mxu0 0.0
        %330 = vmatprep.subr.mxu0 0.0
        %331 = vmatpush1.xpose.msra.mxu0 0.0
        %332 = vmatprep.subr.mxu0 0.0
        %333 = vmatpush1.xpose.msra.mxu0 0.0
        %334 = vmatprep.subr.mxu0 0.0
        %335 = vmatpush1.xpose.msra.mxu0 0.0
        %336 = vmatprep.subr.mxu0 0.0
        %337 = vmatpush1.xpose.msra.mxu0 0.0
        %338 = vmatprep.subr.mxu0 0.0
        %339 = vmatpush1.xpose.msra.mxu0 0.0
        %340 = vmatprep.subr.mxu0 0.0
        %341 = vmatpush1.xpose.msra.mxu0 0.0
        %342 = vmatprep.subr.mxu0 0.0
        %343 = vmatpush1.xpose.msra.mxu0 %v310
        %344 = vmatprep.subr.mxu0 0.0
        %345 = vmatpush2.xpose.msra.mxu0 0.0
        %346 = vmatprep.subr.mxu0 0.0
        %347 = vmatpush2.xpose.msra.mxu0 0.0
        %348 = vmatprep.subr.mxu0 0.0
        %349 = vmatpush2.xpose.msra.mxu0 0.0
        %350 = vmatprep.subr.mxu0 0.0
        %351 = vmatpush2.xpose.msra.mxu0 0.0
        %352 = vmatprep.subr.mxu0 0.0
        %353 = vmatpush2.xpose.msra.mxu0 0.0
        %354 = vmatprep.subr.mxu0 0.0
        %355 = vmatpush2.xpose.msra.mxu0 0.0
        %356 = vmatprep.subr.mxu0 0.0
        %357 = vmatpush2.xpose.msra.mxu0 0.0
        %358 = vmatprep.subr.mxu0 0.0
        %359 = vmatpush2.xpose.msra.mxu0 0.0
        %360 = vmatprep.subr.mxu0 0.0
        %361 = vmatpush2.xpose.msra.mxu0 0.0
        %362 = vmatprep.subr.mxu0 0.0
        %363 = vmatpush2.xpose.msra.mxu0 0.0
        %364 = vmatprep.subr.mxu0 0.0
        %365 = vmatpush2.xpose.msra.mxu0 0.0
        %366 = vmatprep.subr.mxu0 0.0
        %367 = vmatpush2.xpose.msra.mxu0 0.0
        %368 = vmatprep.subr.mxu0 0.0
        %369 = vmatpush2.xpose.msra.mxu0 0.0
        %370 = vmatprep.subr.mxu0 0.0
        %371 = vmatpush2.xpose.msra.mxu0 0.0
        %372 = vmatprep.subr.mxu0 0.0
        %373 = vmatpush2.xpose.msra.mxu0 0.0
        %374 = vmatprep.subr.mxu0 0.0
        %375 = vmatpush2.xpose.msra.mxu0 0.0
        %376 = vmatprep.mubr.f32.mxu0 0.0
        %377 = vmatmul.mubr.f32.gmra.mxu0 %v308
        %v378 = vpop.f32.mrf.mxu0
        %v379 = vadd.f32 0.0, %v378
        %v380 = vpop.f32.mrf.mxu0
        %381 = vdwg.mxu0
        %v382 = vsel %vm307, %v379, -inf
        %383 = vmax.xlane.f32.xlu0 %v382
        %v384 = vpop.xlane.xlu0 %383
        %v385 = vsub.f32 %v379, %v384
        %v386 = vmul.f32 %v385, 1.442695
        %v387 = vpow.pop %v386
        %v388 = vsel %vm307, %v387, 0.0
        %389 = vadd.xlane.f32.xlu0 %v388
        %v390 = vpop.xlane.xlu0 %389
        %v391 = vrcp.pop %v390
        %v392 = vmul.f32 %v387, %v391
        %393 = vrot.lane.b32.xlu0 %v299, 64
        %v394 = vpop.permute.xlu0 %393
        %v397 = vsel %vm307, %v392, 0
        %399 = vmatprep.subr.mxu0 0.0
        %400 = vmatpush1.msra.mxu0 0.0
        %401 = vmatprep.subr.mxu0 0.0
        %402 = vmatpush1.msra.mxu0 0.0
        %403 = vmatprep.subr.mxu0 0.0
        %404 = vmatpush1.msra.mxu0 0.0
        %405 = vmatprep.subr.mxu0 0.0
        %406 = vmatpush1.msra.mxu0 0.0
        %407 = vmatprep.subr.mxu0 0.0
        %408 = vmatpush1.msra.mxu0 0.0
        %409 = vmatprep.subr.mxu0 0.0
        %410 = vmatpush1.msra.mxu0 0.0
        %411 = vmatprep.subr.mxu0 0.0
        %412 = vmatpush1.msra.mxu0 0.0
        %413 = vmatprep.subr.mxu0 0.0
        %414 = vmatpush1.msra.mxu0 0.0
        %415 = vmatprep.subr.mxu0 0.0
        %416 = vmatpush1.msra.mxu0 0.0
        %417 = vmatprep.subr.mxu0 0.0
        %418 = vmatpush1.msra.mxu0 0.0
        %419 = vmatprep.subr.mxu0 0.0
        %420 = vmatpush1.msra.mxu0 0.0
        %421 = vmatprep.subr.mxu0 0.0
        %422 = vmatpush1.msra.mxu0 0.0
        %423 = vmatprep.subr.mxu0 0.0
        %424 = vmatpush1.msra.mxu0 0.0
        %425 = vmatprep.subr.mxu0 0.0
        %426 = vmatpush1.msra.mxu0 0.0
        %427 = vmatprep.subr.mxu0 0.0
        %428 = vmatpush1.msra.mxu0 0.0
        %429 = vmatprep.subr.mxu0 0.0
        %430 = vmatpush1.msra.mxu0 %v394
        %431 = vmatprep.subr.mxu0 0.0
        %432 = vmatpush2.msra.mxu0 0.0
        %433 = vmatprep.subr.mxu0 0.0
        %434 = vmatpush2.msra.mxu0 0.0
        %435 = vmatprep.subr.mxu0 0.0
        %436 = vmatpush2.msra.mxu0 0.0
        %437 = vmatprep.subr.mxu0 0.0
        %438 = vmatpush2.msra.mxu0 0.0
        %439 = vmatprep.subr.mxu0 0.0
        %440 = vmatpush2.msra.mxu0 0.0
        %441 = vmatprep.subr.mxu0 0.0
        %442 = vmatpush2.msra.mxu0 0.0
        %443 = vmatprep.subr.mxu0 0.0
        %444 = vmatpush2.msra.mxu0 0.0
        %445 = vmatprep.subr.mxu0 0.0
        %446 = vmatpush2.msra.mxu0 0.0
        %447 = vmatprep.subr.mxu0 0.0
        %448 = vmatpush2.msra.mxu0 0.0
        %449 = vmatprep.subr.mxu0 0.0
        %450 = vmatpush2.msra.mxu0 0.0
        %451 = vmatprep.subr.mxu0 0.0
        %452 = vmatpush2.msra.mxu0 0.0
        %453 = vmatprep.subr.mxu0 0.0
        %454 = vmatpush2.msra.mxu0 0.0
        %455 = vmatprep.subr.mxu0 0.0
        %456 = vmatpush2.msra.mxu0 0.0
        %457 = vmatprep.subr.mxu0 0.0
        %458 = vmatpush2.msra.mxu0 0.0
        %459 = vmatprep.subr.mxu0 0.0
        %460 = vmatpush2.msra.mxu0 0.0
        %461 = vmatprep.subr.mxu0 0.0
        %462 = vmatpush2.msra.mxu0 0.0
        %463 = vmatprep.mubr.f32.mxu0 0.0
        %464 = vmatmul.mubr.f32.gmra.mxu0 %v397
        %v465 = vpop.f32.mrf.mxu0
        %v466 = vadd.f32 0.0, %v465
        %v467 = vpop.f32.mrf.mxu0
        %468 = vdwg.mxu0
        %469 = vst.msk [vmem:[#allocation2] sm:$0xff] %vm307, %v466
        %470 = vrot.lane.b32.xlu0 %v299, 120
        %v471 = vpop.permute.xlu0 %470
        %472 = vrot.lane.b32.xlu0 %v299, 88
        %v473 = vpop.permute.xlu0 %472
        %v474 = vsel %vm307, %v471, 0
        %v476 = vsel %vm307, %v473, 0
        %478 = vmatprep.subr.mxu0 0.0
        %479 = vmatpush1.xpose.msra.mxu0 0.0
        %480 = vmatprep.subr.mxu0 0.0
        %481 = vmatpush1.xpose.msra.mxu0 0.0
        %482 = vmatprep.subr.mxu0 0.0
        %483 = vmatpush1.xpose.msra.mxu0 0.0
        %484 = vmatprep.subr.mxu0 0.0
        %485 = vmatpush1.xpose.msra.mxu0 0.0
        %486 = vmatprep.subr.mxu0 0.0
        %487 = vmatpush1.xpose.msra.mxu0 0.0
        %488 = vmatprep.subr.mxu0 0.0
        %489 = vmatpush1.xpose.msra.mxu0 0.0
        %490 = vmatprep.subr.mxu0 0.0
        %491 = vmatpush1.xpose.msra.mxu0 0.0
        %492 = vmatprep.subr.mxu0 0.0
        %493 = vmatpush1.xpose.msra.mxu0 0.0
        %494 = vmatprep.subr.mxu0 0.0
        %495 = vmatpush1.xpose.msra.mxu0 0.0
        %496 = vmatprep.subr.mxu0 0.0
        %497 = vmatpush1.xpose.msra.mxu0 0.0
        %498 = vmatprep.subr.mxu0 0.0
        %499 = vmatpush1.xpose.msra.mxu0 0.0
        %500 = vmatprep.subr.mxu0 0.0
        %501 = vmatpush1.xpose.msra.mxu0 0.0
        %502 = vmatprep.subr.mxu0 0.0
        %503 = vmatpush1.xpose.msra.mxu0 0.0
        %504 = vmatprep.subr.mxu0 0.0
        %505 = vmatpush1.xpose.msra.mxu0 0.0
        %506 = vmatprep.subr.mxu0 0.0
        %507 = vmatpush1.xpose.msra.mxu0 0.0
        %508 = vmatprep.subr.mxu0 0.0
        %509 = vmatpush1.xpose.msra.mxu0 %v476
        %510 = vmatprep.subr.mxu0 0.0
        %511 = vmatpush2.xpose.msra.mxu0 0.0
        %512 = vmatprep.subr.mxu0 0.0
        %513 = vmatpush2.xpose.msra.mxu0 0.0
        %514 = vmatprep.subr.mxu0 0.0
        %515 = vmatpush2.xpose.msra.mxu0 0.0
        %516 = vmatprep.subr.mxu0 0.0
        %517 = vmatpush2.xpose.msra.mxu0 0.0
        %518 = vmatprep.subr.mxu0 0.0
        %519 = vmatpush2.xpose.msra.mxu0 0.0
        %520 = vmatprep.subr.mxu0 0.0
        %521 = vmatpush2.xpose.msra.mxu0 0.0
        %522 = vmatprep.subr.mxu0 0.0
        %523 = vmatpush2.xpose.msra.mxu0 0.0
        %524 = vmatprep.subr.mxu0 0.0
        %525 = vmatpush2.xpose.msra.mxu0 0.0
        %526 = vmatprep.subr.mxu0 0.0
        %527 = vmatpush2.xpose.msra.mxu0 0.0
        %528 = vmatprep.subr.mxu0 0.0
        %529 = vmatpush2.xpose.msra.mxu0 0.0
        %530 = vmatprep.subr.mxu0 0.0
        %531 = vmatpush2.xpose.msra.mxu0 0.0
        %532 = vmatprep.subr.mxu0 0.0
        %533 = vmatpush2.xpose.msra.mxu0 0.0
        %534 = vmatprep.subr.mxu0 0.0
        %535 = vmatpush2.xpose.msra.mxu0 0.0
        %536 = vmatprep.subr.mxu0 0.0
        %537 = vmatpush2.xpose.msra.mxu0 0.0
        %538 = vmatprep.subr.mxu0 0.0
        %539 = vmatpush2.xpose.msra.mxu0 0.0
        %540 = vmatprep.subr.mxu0 0.0
        %541 = vmatpush2.xpose.msra.mxu0 0.0
        %542 = vmatprep.mubr.f32.mxu0 0.0
        %543 = vmatmul.mubr.f32.gmra.mxu0 %v474
        %v544 = vpop.f32.mrf.mxu0
        %v545 = vadd.f32 0.0, %v544
        %v546 = vpop.f32.mrf.mxu0
        %547 = vdwg.mxu0
        %v548 = vsel %vm307, %v545, -inf
        %549 = vmax.xlane.f32.xlu0 %v548
        %v550 = vpop.xlane.xlu0 %549
        %v551 = vsub.f32 %v545, %v550
        %v552 = vmul.f32 %v551, 1.442695
        %v553 = vpow.pop %v552
        %v554 = vsel %vm307, %v553, 0.0
        %555 = vadd.xlane.f32.xlu0 %v554
        %v556 = vpop.xlane.xlu0 %555
        %v557 = vrcp.pop %v556
        %v558 = vmul.f32 %v553, %v557
        %559 = vrot.lane.b32.xlu0 %v299, 56
        %v560 = vpop.permute.xlu0 %559
        %v563 = vsel %vm307, %v558, 0
        %565 = vmatprep.subr.mxu0 0.0
        %566 = vmatpush1.msra.mxu0 0.0
        %567 = vmatprep.subr.mxu0 0.0
        %568 = vmatpush1.msra.mxu0 0.0
        %569 = vmatprep.subr.mxu0 0.0
        %570 = vmatpush1.msra.mxu0 0.0
        %571 = vmatprep.subr.mxu0 0.0
        %572 = vmatpush1.msra.mxu0 0.0
        %573 = vmatprep.subr.mxu0 0.0
        %574 = vmatpush1.msra.mxu0 0.0
        %575 = vmatprep.subr.mxu0 0.0
        %576 = vmatpush1.msra.mxu0 0.0
        %577 = vmatprep.subr.mxu0 0.0
        %578 = vmatpush1.msra.mxu0 0.0
        %579 = vmatprep.subr.mxu0 0.0
        %580 = vmatpush1.msra.mxu0 0.0
        %581 = vmatprep.subr.mxu0 0.0
        %582 = vmatpush1.msra.mxu0 0.0
        %583 = vmatprep.subr.mxu0 0.0
        %584 = vmatpush1.msra.mxu0 0.0
        %585 = vmatprep.subr.mxu0 0.0
        %586 = vmatpush1.msra.mxu0 0.0
        %587 = vmatprep.subr.mxu0 0.0
        %588 = vmatpush1.msra.mxu0 0.0
        %589 = vmatprep.subr.mxu0 0.0
        %590 = vmatpush1.msra.mxu0 0.0
        %591 = vmatprep.subr.mxu0 0.0
        %592 = vmatpush1.msra.mxu0 0.0
        %593 = vmatprep.subr.mxu0 0.0
        %594 = vmatpush1.msra.mxu0 0.0
        %595 = vmatprep.subr.mxu0 0.0
        %596 = vmatpush1.msra.mxu0 %v560
        %597 = vmatprep.subr.mxu0 0.0
        %598 = vmatpush2.msra.mxu0 0.0
        %599 = vmatprep.subr.mxu0 0.0
        %600 = vmatpush2.msra.mxu0 0.0
        %601 = vmatprep.subr.mxu0 0.0
        %602 = vmatpush2.msra.mxu0 0.0
        %603 = vmatprep.subr.mxu0 0.0
        %604 = vmatpush2.msra.mxu0 0.0
        %605 = vmatprep.subr.mxu0 0.0
        %606 = vmatpush2.msra.mxu0 0.0
        %607 = vmatprep.subr.mxu0 0.0
        %608 = vmatpush2.msra.mxu0 0.0
        %609 = vmatprep.subr.mxu0 0.0
        %610 = vmatpush2.msra.mxu0 0.0
        %611 = vmatprep.subr.mxu0 0.0
        %612 = vmatpush2.msra.mxu0 0.0
        %613 = vmatprep.subr.mxu0 0.0
        %614 = vmatpush2.msra.mxu0 0.0
        %615 = vmatprep.subr.mxu0 0.0
        %616 = vmatpush2.msra.mxu0 0.0
        %617 = vmatprep.subr.mxu0 0.0
        %618 = vmatpush2.msra.mxu0 0.0
        %619 = vmatprep.subr.mxu0 0.0
        %620 = vmatpush2.msra.mxu0 0.0
        %621 = vmatprep.subr.mxu0 0.0
        %622 = vmatpush2.msra.mxu0 0.0
        %623 = vmatprep.subr.mxu0 0.0
        %624 = vmatpush2.msra.mxu0 0.0
        %625 = vmatprep.subr.mxu0 0.0
        %626 = vmatpush2.msra.mxu0 0.0
        %627 = vmatprep.subr.mxu0 0.0
        %628 = vmatpush2.msra.mxu0 0.0
        %629 = vmatprep.mubr.f32.mxu0 0.0
        %630 = vmatmul.mubr.f32.gmra.mxu0 %v563
        %v631 = vpop.f32.mrf.mxu0
        %v632 = vadd.f32 0.0, %v631
        %v633 = vpop.f32.mrf.mxu0
        %634 = vdwg.mxu0
        %636 = vrot.lane.b32.xlu0 %v632, 8
        %v637 = vpop.permute.xlu0 %636
        %vm639 = vcmask 130112
        %640 = vst.msk [vmem:[#allocation2] sm:$0xff] %vm639, %v637
        %641 = vrot.lane.b32.xlu0 %v299, 112
        %v642 = vpop.permute.xlu0 %641
        %643 = vrot.lane.b32.xlu0 %v299, 80
        %v644 = vpop.permute.xlu0 %643
        %v645 = vsel %vm307, %v642, 0
        %v647 = vsel %vm307, %v644, 0
        %649 = vmatprep.subr.mxu0 0.0
        %650 = vmatpush1.xpose.msra.mxu0 0.0
        %651 = vmatprep.subr.mxu0 0.0
        %652 = vmatpush1.xpose.msra.mxu0 0.0
        %653 = vmatprep.subr.mxu0 0.0
        %654 = vmatpush1.xpose.msra.mxu0 0.0
        %655 = vmatprep.subr.mxu0 0.0
        %656 = vmatpush1.xpose.msra.mxu0 0.0
        %657 = vmatprep.subr.mxu0 0.0
        %658 = vmatpush1.xpose.msra.mxu0 0.0
        %659 = vmatprep.subr.mxu0 0.0
        %660 = vmatpush1.xpose.msra.mxu0 0.0
        %661 = vmatprep.subr.mxu0 0.0
        %662 = vmatpush1.xpose.msra.mxu0 0.0
        %663 = vmatprep.subr.mxu0 0.0
        %664 = vmatpush1.xpose.msra.mxu0 0.0
        %665 = vmatprep.subr.mxu0 0.0
        %666 = vmatpush1.xpose.msra.mxu0 0.0
        %667 = vmatprep.subr.mxu0 0.0
        %668 = vmatpush1.xpose.msra.mxu0 0.0
        %669 = vmatprep.subr.mxu0 0.0
        %670 = vmatpush1.xpose.msra.mxu0 0.0
        %671 = vmatprep.subr.mxu0 0.0
        %672 = vmatpush1.xpose.msra.mxu0 0.0
        %673 = vmatprep.subr.mxu0 0.0
        %674 = vmatpush1.xpose.msra.mxu0 0.0
        %675 = vmatprep.subr.mxu0 0.0
        %676 = vmatpush1.xpose.msra.mxu0 0.0
        %677 = vmatprep.subr.mxu0 0.0
        %678 = vmatpush1.xpose.msra.mxu0 0.0
        %679 = vmatprep.subr.mxu0 0.0
        %680 = vmatpush1.xpose.msra.mxu0 %v647
        %681 = vmatprep.subr.mxu0 0.0
        %682 = vmatpush2.xpose.msra.mxu0 0.0
        %683 = vmatprep.subr.mxu0 0.0
        %684 = vmatpush2.xpose.msra.mxu0 0.0
        %685 = vmatprep.subr.mxu0 0.0
        %686 = vmatpush2.xpose.msra.mxu0 0.0
        %687 = vmatprep.subr.mxu0 0.0
        %688 = vmatpush2.xpose.msra.mxu0 0.0
        %689 = vmatprep.subr.mxu0 0.0
        %690 = vmatpush2.xpose.msra.mxu0 0.0
        %691 = vmatprep.subr.mxu0 0.0
        %692 = vmatpush2.xpose.msra.mxu0 0.0
        %693 = vmatprep.subr.mxu0 0.0
        %694 = vmatpush2.xpose.msra.mxu0 0.0
        %695 = vmatprep.subr.mxu0 0.0
        %696 = vmatpush2.xpose.msra.mxu0 0.0
        %697 = vmatprep.subr.mxu0 0.0
        %698 = vmatpush2.xpose.msra.mxu0 0.0
        %699 = vmatprep.subr.mxu0 0.0
        %700 = vmatpush2.xpose.msra.mxu0 0.0
        %701 = vmatprep.subr.mxu0 0.0
        %702 = vmatpush2.xpose.msra.mxu0 0.0
        %703 = vmatprep.subr.mxu0 0.0
        %704 = vmatpush2.xpose.msra.mxu0 0.0
        %705 = vmatprep.subr.mxu0 0.0
        %706 = vmatpush2.xpose.msra.mxu0 0.0
        %707 = vmatprep.subr.mxu0 0.0
        %708 = vmatpush2.xpose.msra.mxu0 0.0
        %709 = vmatprep.subr.mxu0 0.0
        %710 = vmatpush2.xpose.msra.mxu0 0.0
        %711 = vmatprep.subr.mxu0 0.0
        %712 = vmatpush2.xpose.msra.mxu0 0.0
        %713 = vmatprep.mubr.f32.mxu0 0.0
        %714 = vmatmul.mubr.f32.gmra.mxu0 %v645
        %v715 = vpop.f32.mrf.mxu0
        %v716 = vadd.f32 0.0, %v715
        %v717 = vpop.f32.mrf.mxu0
        %718 = vdwg.mxu0
        %v719 = vsel %vm307, %v716, -inf
        %720 = vmax.xlane.f32.xlu0 %v719
        %v721 = vpop.xlane.xlu0 %720
        %v722 = vsub.f32 %v716, %v721
        %v723 = vmul.f32 %v722, 1.442695
        %v724 = vpow.pop %v723
        %v725 = vsel %vm307, %v724, 0.0
        %726 = vadd.xlane.f32.xlu0 %v725
        %v727 = vpop.xlane.xlu0 %726
        %v728 = vrcp.pop %v727
        %v729 = vmul.f32 %v724, %v728
        %730 = vrot.lane.b32.xlu0 %v299, 48
        %v731 = vpop.permute.xlu0 %730
        %v734 = vsel %vm307, %v729, 0
        %736 = vmatprep.subr.mxu0 0.0
        %737 = vmatpush1.msra.mxu0 0.0
        %738 = vmatprep.subr.mxu0 0.0
        %739 = vmatpush1.msra.mxu0 0.0
        %740 = vmatprep.subr.mxu0 0.0
        %741 = vmatpush1.msra.mxu0 0.0
        %742 = vmatprep.subr.mxu0 0.0
        %743 = vmatpush1.msra.mxu0 0.0
        %744 = vmatprep.subr.mxu0 0.0
        %745 = vmatpush1.msra.mxu0 0.0
        %746 = vmatprep.subr.mxu0 0.0
        %747 = vmatpush1.msra.mxu0 0.0
        %748 = vmatprep.subr.mxu0 0.0
        %749 = vmatpush1.msra.mxu0 0.0
        %750 = vmatprep.subr.mxu0 0.0
        %751 = vmatpush1.msra.mxu0 0.0
        %752 = vmatprep.subr.mxu0 0.0
        %753 = vmatpush1.msra.mxu0 0.0
        %754 = vmatprep.subr.mxu0 0.0
        %755 = vmatpush1.msra.mxu0 0.0
        %756 = vmatprep.subr.mxu0 0.0
        %757 = vmatpush1.msra.mxu0 0.0
        %758 = vmatprep.subr.mxu0 0.0
        %759 = vmatpush1.msra.mxu0 0.0
        %760 = vmatprep.subr.mxu0 0.0
        %761 = vmatpush1.msra.mxu0 0.0
        %762 = vmatprep.subr.mxu0 0.0
        %763 = vmatpush1.msra.mxu0 0.0
        %764 = vmatprep.subr.mxu0 0.0
        %765 = vmatpush1.msra.mxu0 0.0
        %766 = vmatprep.subr.mxu0 0.0
        %767 = vmatpush1.msra.mxu0 %v731
        %768 = vmatprep.subr.mxu0 0.0
        %769 = vmatpush2.msra.mxu0 0.0
        %770 = vmatprep.subr.mxu0 0.0
        %771 = vmatpush2.msra.mxu0 0.0
        %772 = vmatprep.subr.mxu0 0.0
        %773 = vmatpush2.msra.mxu0 0.0
        %774 = vmatprep.subr.mxu0 0.0
        %775 = vmatpush2.msra.mxu0 0.0
        %776 = vmatprep.subr.mxu0 0.0
        %777 = vmatpush2.msra.mxu0 0.0
        %778 = vmatprep.subr.mxu0 0.0
        %779 = vmatpush2.msra.mxu0 0.0
        %780 = vmatprep.subr.mxu0 0.0
        %781 = vmatpush2.msra.mxu0 0.0
        %782 = vmatprep.subr.mxu0 0.0
        %783 = vmatpush2.msra.mxu0 0.0
        %784 = vmatprep.subr.mxu0 0.0
        %785 = vmatpush2.msra.mxu0 0.0
        %786 = vmatprep.subr.mxu0 0.0
        %787 = vmatpush2.msra.mxu0 0.0
        %788 = vmatprep.subr.mxu0 0.0
        %789 = vmatpush2.msra.mxu0 0.0
        %790 = vmatprep.subr.mxu0 0.0
        %791 = vmatpush2.msra.mxu0 0.0
        %792 = vmatprep.subr.mxu0 0.0
        %793 = vmatpush2.msra.mxu0 0.0
        %794 = vmatprep.subr.mxu0 0.0
        %795 = vmatpush2.msra.mxu0 0.0
        %796 = vmatprep.subr.mxu0 0.0
        %797 = vmatpush2.msra.mxu0 0.0
        %798 = vmatprep.subr.mxu0 0.0
        %799 = vmatpush2.msra.mxu0 0.0
        %800 = vmatprep.mubr.f32.mxu0 0.0
        %801 = vmatmul.mubr.f32.gmra.mxu0 %v734
        %v802 = vpop.f32.mrf.mxu0
        %v803 = vadd.f32 0.0, %v802
        %v804 = vpop.f32.mrf.mxu0
        %805 = vdwg.mxu0
        %807 = vrot.lane.b32.xlu0 %v803, 16
        %v808 = vpop.permute.xlu0 %807
        %vm810 = vcmask 195712
        %811 = vst.msk [vmem:[#allocation2] sm:$0xff] %vm810, %v808
        %812 = vrot.lane.b32.xlu0 %v299, 104
        %v813 = vpop.permute.xlu0 %812
        %814 = vrot.lane.b32.xlu0 %v299, 72
        %v815 = vpop.permute.xlu0 %814
        %v816 = vsel %vm307, %v813, 0
        %v818 = vsel %vm307, %v815, 0
        %820 = vmatprep.subr.mxu0 0.0
        %821 = vmatpush1.xpose.msra.mxu0 0.0
        %822 = vmatprep.subr.mxu0 0.0
        %823 = vmatpush1.xpose.msra.mxu0 0.0
        %824 = vmatprep.subr.mxu0 0.0
        %825 = vmatpush1.xpose.msra.mxu0 0.0
        %826 = vmatprep.subr.mxu0 0.0
        %827 = vmatpush1.xpose.msra.mxu0 0.0
        %828 = vmatprep.subr.mxu0 0.0
        %829 = vmatpush1.xpose.msra.mxu0 0.0
        %830 = vmatprep.subr.mxu0 0.0
        %831 = vmatpush1.xpose.msra.mxu0 0.0
        %832 = vmatprep.subr.mxu0 0.0
        %833 = vmatpush1.xpose.msra.mxu0 0.0
        %834 = vmatprep.subr.mxu0 0.0
        %835 = vmatpush1.xpose.msra.mxu0 0.0
        %836 = vmatprep.subr.mxu0 0.0
        %837 = vmatpush1.xpose.msra.mxu0 0.0
        %838 = vmatprep.subr.mxu0 0.0
        %839 = vmatpush1.xpose.msra.mxu0 0.0
        %840 = vmatprep.subr.mxu0 0.0
        %841 = vmatpush1.xpose.msra.mxu0 0.0
        %842 = vmatprep.subr.mxu0 0.0
        %843 = vmatpush1.xpose.msra.mxu0 0.0
        %844 = vmatprep.subr.mxu0 0.0
        %845 = vmatpush1.xpose.msra.mxu0 0.0
        %846 = vmatprep.subr.mxu0 0.0
        %847 = vmatpush1.xpose.msra.mxu0 0.0
        %848 = vmatprep.subr.mxu0 0.0
        %849 = vmatpush1.xpose.msra.mxu0 0.0
        %850 = vmatprep.subr.mxu0 0.0
        %851 = vmatpush1.xpose.msra.mxu0 %v818
        %852 = vmatprep.subr.mxu0 0.0
        %853 = vmatpush2.xpose.msra.mxu0 0.0
        %854 = vmatprep.subr.mxu0 0.0
        %855 = vmatpush2.xpose.msra.mxu0 0.0
        %856 = vmatprep.subr.mxu0 0.0
        %857 = vmatpush2.xpose.msra.mxu0 0.0
        %858 = vmatprep.subr.mxu0 0.0
        %859 = vmatpush2.xpose.msra.mxu0 0.0
        %860 = vmatprep.subr.mxu0 0.0
        %861 = vmatpush2.xpose.msra.mxu0 0.0
        %862 = vmatprep.subr.mxu0 0.0
        %863 = vmatpush2.xpose.msra.mxu0 0.0
        %864 = vmatprep.subr.mxu0 0.0
        %865 = vmatpush2.xpose.msra.mxu0 0.0
        %866 = vmatprep.subr.mxu0 0.0
        %867 = vmatpush2.xpose.msra.mxu0 0.0
        %868 = vmatprep.subr.mxu0 0.0
        %869 = vmatpush2.xpose.msra.mxu0 0.0
        %870 = vmatprep.subr.mxu0 0.0
        %871 = vmatpush2.xpose.msra.mxu0 0.0
        %872 = vmatprep.subr.mxu0 0.0
        %873 = vmatpush2.xpose.msra.mxu0 0.0
        %874 = vmatprep.subr.mxu0 0.0
        %875 = vmatpush2.xpose.msra.mxu0 0.0
        %876 = vmatprep.subr.mxu0 0.0
        %877 = vmatpush2.xpose.msra.mxu0 0.0
        %878 = vmatprep.subr.mxu0 0.0
        %879 = vmatpush2.xpose.msra.mxu0 0.0
        %880 = vmatprep.subr.mxu0 0.0
        %881 = vmatpush2.xpose.msra.mxu0 0.0
        %882 = vmatprep.subr.mxu0 0.0
        %883 = vmatpush2.xpose.msra.mxu0 0.0
        %884 = vmatprep.mubr.f32.mxu0 0.0
        %885 = vmatmul.mubr.f32.gmra.mxu0 %v816
        %v886 = vpop.f32.mrf.mxu0
        %v887 = vadd.f32 0.0, %v886
        %v888 = vpop.f32.mrf.mxu0
        %889 = vdwg.mxu0
        %v890 = vsel %vm307, %v887, -inf
        %891 = vmax.xlane.f32.xlu0 %v890
        %v892 = vpop.xlane.xlu0 %891
        %v893 = vsub.f32 %v887, %v892
        %v894 = vmul.f32 %v893, 1.442695
        %v895 = vpow.pop %v894
        %v896 = vsel %vm307, %v895, 0.0
        %897 = vadd.xlane.f32.xlu0 %v896
        %v898 = vpop.xlane.xlu0 %897
        %v899 = vrcp.pop %v898
        %v900 = vmul.f32 %v895, %v899
        %901 = vrot.lane.b32.xlu0 %v299, 40
        %v902 = vpop.permute.xlu0 %901
        %v905 = vsel %vm307, %v900, 0
        %907 = vmatprep.subr.mxu0 0.0
        %908 = vmatpush1.msra.mxu0 0.0
        %909 = vmatprep.subr.mxu0 0.0
        %910 = vmatpush1.msra.mxu0 0.0
        %911 = vmatprep.subr.mxu0 0.0
        %912 = vmatpush1.msra.mxu0 0.0
        %913 = vmatprep.subr.mxu0 0.0
        %914 = vmatpush1.msra.mxu0 0.0
        %915 = vmatprep.subr.mxu0 0.0
        %916 = vmatpush1.msra.mxu0 0.0
        %917 = vmatprep.subr.mxu0 0.0
        %918 = vmatpush1.msra.mxu0 0.0
        %919 = vmatprep.subr.mxu0 0.0
        %920 = vmatpush1.msra.mxu0 0.0
        %921 = vmatprep.subr.mxu0 0.0
        %922 = vmatpush1.msra.mxu0 0.0
        %923 = vmatprep.subr.mxu0 0.0
        %924 = vmatpush1.msra.mxu0 0.0
        %925 = vmatprep.subr.mxu0 0.0
        %926 = vmatpush1.msra.mxu0 0.0
        %927 = vmatprep.subr.mxu0 0.0
        %928 = vmatpush1.msra.mxu0 0.0
        %929 = vmatprep.subr.mxu0 0.0
        %930 = vmatpush1.msra.mxu0 0.0
        %931 = vmatprep.subr.mxu0 0.0
        %932 = vmatpush1.msra.mxu0 0.0
        %933 = vmatprep.subr.mxu0 0.0
        %934 = vmatpush1.msra.mxu0 0.0
        %935 = vmatprep.subr.mxu0 0.0
        %936 = vmatpush1.msra.mxu0 0.0
        %937 = vmatprep.subr.mxu0 0.0
        %938 = vmatpush1.msra.mxu0 %v902
        %939 = vmatprep.subr.mxu0 0.0
        %940 = vmatpush2.msra.mxu0 0.0
        %941 = vmatprep.subr.mxu0 0.0
        %942 = vmatpush2.msra.mxu0 0.0
        %943 = vmatprep.subr.mxu0 0.0
        %944 = vmatpush2.msra.mxu0 0.0
        %945 = vmatprep.subr.mxu0 0.0
        %946 = vmatpush2.msra.mxu0 0.0
        %947 = vmatprep.subr.mxu0 0.0
        %948 = vmatpush2.msra.mxu0 0.0
        %949 = vmatprep.subr.mxu0 0.0
        %950 = vmatpush2.msra.mxu0 0.0
        %951 = vmatprep.subr.mxu0 0.0
        %952 = vmatpush2.msra.mxu0 0.0
        %953 = vmatprep.subr.mxu0 0.0
        %954 = vmatpush2.msra.mxu0 0.0
        %955 = vmatprep.subr.mxu0 0.0
        %956 = vmatpush2.msra.mxu0 0.0
        %957 = vmatprep.subr.mxu0 0.0
        %958 = vmatpush2.msra.mxu0 0.0
        %959 = vmatprep.subr.mxu0 0.0
        %960 = vmatpush2.msra.mxu0 0.0
        %961 = vmatprep.subr.mxu0 0.0
        %962 = vmatpush2.msra.mxu0 0.0
        %963 = vmatprep.subr.mxu0 0.0
        %964 = vmatpush2.msra.mxu0 0.0
        %965 = vmatprep.subr.mxu0 0.0
        %966 = vmatpush2.msra.mxu0 0.0
        %967 = vmatprep.subr.mxu0 0.0
        %968 = vmatpush2.msra.mxu0 0.0
        %969 = vmatprep.subr.mxu0 0.0
        %970 = vmatpush2.msra.mxu0 0.0
        %971 = vmatprep.mubr.f32.mxu0 0.0
        %972 = vmatmul.mubr.f32.gmra.mxu0 %v905
        %v973 = vpop.f32.mrf.mxu0
        %v974 = vadd.f32 0.0, %v973
        %v975 = vpop.f32.mrf.mxu0
        %976 = vdwg.mxu0
        %978 = vrot.lane.b32.xlu0 %v974, 24
        %v979 = vpop.permute.xlu0 %978
        %vm981 = vcmask 261312
        %982 = vst.msk [vmem:[#allocation2] sm:$0xff] %vm981, %v979
        %v983 = vld [vmem:[#allocation2] sm:$0xff]
        %v984 = vpack.c.bf16 %v983, %v983
        %v985 = vld [vmem:[#allocation8] sm:$0xf]
        %v986 = vld [vmem:[#allocation8 + $0x4] sm:$0xf]
        %v987 = vld [vmem:[#allocation8 + $0x8] sm:$0xf]
        %v988 = vld [vmem:[#allocation8 + $0xc] sm:$0xf]
        %v989 = vld [vmem:[%s3] sm:$0x1]
        %v991 = vlaneseq
        %v992 = vshrl.u32 %v991, 7
        %v993 = vsub.s32 0, %v992
        %v994 = vrot.slane %v989, %v993
        %v1000 = vunpack.c.l.b16 %v985
        %v1001 = vunpack.c.l.b16 %v986
        %v1002 = vunpack.c.l.b16 %v987
        %v1003 = vunpack.c.l.b16 %v988
        %v1004 = vpack.c.b16 %v1001, %v1000
        %v1005 = vpack.c.b16 %v1003, %v1002
        %v1009 = vsel %vm260, %v984, 0
        %1011 = vmatprep.subr.bf16.mxu0 0
        %1012 = vmatpush1.bf16.msra.mxu0 0
        %1013 = vmatprep.subr.bf16.mxu0 0
        %1014 = vmatpush1.bf16.msra.mxu0 0
        %1015 = vmatprep.subr.bf16.mxu0 0
        %1016 = vmatpush1.bf16.msra.mxu0 0
        %1017 = vmatprep.subr.bf16.mxu0 0
        %1018 = vmatpush1.bf16.msra.mxu0 0
        %1019 = vmatprep.subr.bf16.mxu0 0
        %1020 = vmatpush1.bf16.msra.mxu0 0
        %1021 = vmatprep.subr.bf16.mxu0 0
        %1022 = vmatpush1.bf16.msra.mxu0 0
        %1023 = vmatprep.subr.bf16.mxu0 0
        %1024 = vmatpush1.bf16.msra.mxu0 %v1005
        %1025 = vmatprep.subr.bf16.mxu0 0
        %1026 = vmatpush1.bf16.msra.mxu0 %v1004
        %1027 = vmatprep.subr.bf16.mxu0 0
        %1028 = vmatpush2.bf16.msra.mxu0 0
        %1029 = vmatprep.subr.bf16.mxu0 0
        %1030 = vmatpush2.bf16.msra.mxu0 0
        %1031 = vmatprep.subr.bf16.mxu0 0
        %1032 = vmatpush2.bf16.msra.mxu0 0
        %1033 = vmatprep.subr.bf16.mxu0 0
        %1034 = vmatpush2.bf16.msra.mxu0 0
        %1035 = vmatprep.subr.bf16.mxu0 0
        %1036 = vmatpush2.bf16.msra.mxu0 0
        %1037 = vmatprep.subr.bf16.mxu0 0
        %1038 = vmatpush2.bf16.msra.mxu0 0
        %1039 = vmatprep.subr.bf16.mxu0 0
        %1040 = vmatpush2.bf16.msra.mxu0 0
        %1041 = vmatprep.subr.bf16.mxu0 0
        %1042 = vmatpush2.bf16.msra.mxu0 0
        %1043 = vmatprep.mubr.bf16.mxu0 0
        %1044 = vmatmul.mubr.bf16.gmra.mxu0 %v1009
        %v1045 = vpop.f32.mrf.mxu0
        %v1046 = vadd.f32 %v994, %v1045
        %v1047 = vpop.f32.mrf.mxu0
        %v1048 = vpop.f32.mrf.mxu0
        %v1049 = vpop.f32.mrf.mxu0
        %1050 = vdwg.mxu0
        %1051 = vst.msk [vmem:[%s241] sm:$0xff] %vm260, %v1046
        %s1052 = sand.u32 %s119, 1
        %s1053 = scalar_lea.sflag [#allocation5], %s1052
        %s1054 = sand.u32 %s119, 1
        %s1055 = smul.addr %s1054, 8
        %s1056 = scalar_lea.vmem [#allocation9], %s1055
        // Predicated region
        $region49: #{tpu_custom_call.1} parent=35 // pred_check
          %p1057 = pneg %p129
        $region50: #{tpu_custom_call.1} parent=35 // pred_check_branch
          %1059 = sbr.rel (%p1057) target = $region52
        $region51: #{tpu_custom_call.1} parent=35 // pred_region
          %s1061 = ssub.s32 128, 128
          %1062 = vsyncadd %s1053, %s1061
          %s1063 = smul.addr %s22, 128
          %s1064 = scalar_lea.hbm %s4, %s1063
          %s1066 = sshll.u32 %s1056, 4
          %s1067 = int_to_ptr.vmem [resolvable:$true] %s1066
          %1069 = dma.vmem_to_hbm [thread:$0]  %s1067, 128, %s1064, %s1053
        $region52: #{tpu_custom_call.1} parent=35 // pred_fallthru
          _
      $region36: #{tpu_custom_call.1} parent=5 // pred_fallthru
        _
      %p1070 = scmp.le.s32.totalorder 2, %s17
      // Predicated region
      $region53: #{tpu_custom_call.1} parent=5 // pred_check
        %p1071 = pneg %p1070
      $region54: #{tpu_custom_call.1} parent=5 // pred_check_branch
        %1073 = sbr.rel (%p1071) target = $region56
      $region55: #{tpu_custom_call.1} parent=5 // pred_region
        %s1074 = ssub.s32 %s17, 2
        // Predicated region
        $region57: #{tpu_custom_call.1} parent=55 // pred_check
          %p1075 = pneg %p135
        $region58: #{tpu_custom_call.1} parent=55 // pred_check_branch
          %1077 = sbr.rel (%p1075) target = $region60
        $region59: #{tpu_custom_call.1} parent=55 // pred_region
          %s1078 = sand.u32 %s120, 1
          %s1079 = scalar_lea.sflag [#allocation5], %s1078
          %s1080 = sand.u32 %s120, 1
          %s1081 = smul.addr %s1080, 8
          %s1082 = scalar_lea.vmem [#allocation9], %s1081
          %1083 = dma.done %s1079, 128
        $region60: #{tpu_custom_call.1} parent=55 // pred_fallthru
          _
      $region56: #{tpu_custom_call.1} parent=5 // pred_fallthru
        _
    $region6: #{tpu_custom_call.1} parent=1 // loop_footer
      %s21 = sadd.s32 1, %s17
    $region7: #{tpu_custom_call.1} parent=1 // loop_footer_branch
      %16 = sbr.rel target = $region3
    $region8: #{tpu_custom_call.1} parent=1 // loop_exit
      _
    %1084 = vsyncpa [#allocation4], 1
    %s1085 = scalar_lea.sflag [#allocation4], 1
    %1086 = vsyncpa %s1085, 1
    %1087 = vsyncpa [#allocation7], 1
    %1088 = vsyncpa [#allocation5], 1
    %s1089 = scalar_lea.sflag [#allocation5], 1
    %1090 = vsyncpa %s1089, 1

</llo_original>
